<compile_context>
chip_gen: v7x
topology: tpu7x:2x2x1
jax: 0.10.0
libtpu: 0.0.40
codegen_flags: <defaults>
</compile_context>

<pallas_src>
import math

import jax
import jax.numpy as jnp
from jax.experimental import pallas as pl
from jax.experimental.pallas import tpu as pltpu


# ------------------------------ tiling helpers ------------------------------ #

# ~2 MiB per input block: measured mem-bound streams reach >=85% of the HBM
# roofline at this size; double-buffered in+out stays well inside the scoped
# VMEM budget on every generation (v7x is the tightest at 64 MiB physical).
_TARGET_BLOCK_BYTES = 2 * 1024 * 1024
_LANE_TILE_CAP = 2048                    # max lanes per block along the packed width
_VMEM_LIMIT_BYTES = 32 * 1024 * 1024     # explicit scoped-VMEM budget (v5e default is 16 MiB)


def _sublane_mult(itemsize):
    # Row-tile multiple: 8 for 32-bit, 16 for 16-bit, 32 for 8-bit dtypes.
    return max(8, 32 // max(1, int(itemsize)))


def _plan_layout(n_elems, dim_size, in_itemsize, out_itemsize):
    """Choose (W, rep, lane_tile, row_tile, rows) for a copy-free [rows, W] slab."""
    n_rows_logical = n_elems // dim_size
    k = 128 // math.gcd(dim_size, 128)    # minimal packing making k*D a 128-multiple
    if n_rows_logical % k == 0:
        w = k * dim_size                  # lane-dense packed rows (free reshape)
    else:
        w = dim_size                      # unpacked fallback (free reshape, no copies)
    rep = w // dim_size
    rows = n_elems // w

    # Lane tile: largest divisor of W that is a multiple of 128 and <= cap.
    if w % 128 == 0 and w > _LANE_TILE_CAP:
        units = w // 128
        lt_units = 1
        for d in range(min(units, _LANE_TILE_CAP // 128), 0, -1):
            if units % d == 0:
                lt_units = d
                break
        lane_tile = lt_units * 128
    else:
        lane_tile = w

    # Row tile: largest multiple of the sublane packing near the block-byte target.
    mult = max(_sublane_mult(in_itemsize), _sublane_mult(out_itemsize))
    if rows <= mult:
        row_tile = rows                   # single full-extent block along rows
    else:
        rt = _TARGET_BLOCK_BYTES // max(1, lane_tile * in_itemsize)
        row_tile = max(mult, (min(rt, rows) // mult) * mult)
    return w, rep, lane_tile, row_tile, rows


# ------------------------------- Pallas kernels ------------------------------ #

def _pallas_fused_add_sum(x2d, delta_row, out_dtype, row_tile, lane_tile):
    """One streaming pass: out = x + delta (broadcast) and global f32 sum of x."""
    rows, w = x2d.shape
    gr = pl.cdiv(rows, row_tile)
    gl = w // lane_tile
    ragged = (rows % row_tile) != 0
    in_item = x2d.dtype.itemsize
    out_item = jnp.dtype(out_dtype).itemsize

    def kernel(x_ref, d_ref, o_ref, s_ref, acc_ref):
        i = pl.program_id(0)
        j = pl.program_id(1)

        @pl.when((i == 0) & (j == 0))
        def _():
            acc_ref[...] = jnp.zeros_like(acc_ref)

        x = x_ref[...].astype(jnp.float32)          # single upcast feeds add + sum
        o_ref[...] = (x + d_ref[...]).astype(o_ref.dtype)

        if ragged:
            # Last row block extends past the array edge: OOB reads are garbage and
            # MUST be masked out of the sum (OOB output writes are simply dropped).
            valid = rows - i * row_tile
            row_ids = jax.lax.broadcasted_iota(jnp.int32, x.shape, 0)
            x = jnp.where(row_ids < valid, x, 0.0)
        acc_ref[...] += jnp.sum(x, axis=0, keepdims=True)

        @pl.when((i == gr - 1) & (j == gl - 1))
        def _():
            s_ref[...] = jnp.sum(acc_ref[...], axis=1, keepdims=True)

    # TODO(synk): on v7x, split the grid across the two TensorCores
    # (pltpu.CORE_PARALLEL) with one partial sum per core; kept single-core for
    # portability/compile safety here.
    return pl.pallas_call(
        kernel,
        out_shape=(jax.ShapeDtypeStruct((rows, w), out_dtype),
                   jax.ShapeDtypeStruct((1, 1), jnp.float32)),
        grid_spec=pltpu.PrefetchScalarGridSpec(
            num_scalar_prefetch=0,
            grid=(gr, gl),
            in_specs=[pl.BlockSpec((row_tile, lane_tile), lambda i, j: (i, j)),
                      pl.BlockSpec((1, lane_tile), lambda i, j: (0, j))],
            out_specs=[pl.BlockSpec((row_tile, lane_tile), lambda i, j: (i, j)),
                       pl.BlockSpec((1, 1), lambda i, j: (0, 0))],
            scratch_shapes=[pltpu.VMEM((1, lane_tile), jnp.float32)]),
        compiler_params=pltpu.CompilerParams(
            dimension_semantics=("arbitrary", "arbitrary"),
            vmem_limit_bytes=_VMEM_LIMIT_BYTES),
        cost_estimate=pl.CostEstimate(
            flops=int(2 * rows * w), transcendentals=0,
            bytes_accessed=int(rows * w * (in_item + out_item) + w * 4 + 4)),
        # TODO(synk): if the caller can donate `inputs`, alias x2d -> out here to
        # halve the HBM footprint (input_output_aliases={0: 0}).
    )(x2d, delta_row)


def _pallas_fixup(o2d, corr_row, row_tile, lane_tile):
    """Rare reset path: out += (new_delta - old_delta), aliased in place."""
    rows, w = o2d.shape
    gr = pl.cdiv(rows, row_tile)
    gl = w // lane_tile

    def kernel(o_ref, c_ref, out_ref):
        out_ref[...] = (o_ref[...].astype(jnp.float32) + c_ref[...]).astype(out_ref.dtype)

    return pl.pallas_call(
        kernel,
        out_shape=jax.ShapeDtypeStruct((rows, w), o2d.dtype),
        grid_spec=pltpu.PrefetchScalarGridSpec(
            num_scalar_prefetch=0,
            grid=(gr, gl),
            in_specs=[pl.BlockSpec((row_tile, lane_tile), lambda i, j: (i, j)),
                      pl.BlockSpec((1, lane_tile), lambda i, j: (0, j))],
            out_specs=pl.BlockSpec((row_tile, lane_tile), lambda i, j: (i, j))),
        compiler_params=pltpu.CompilerParams(
            dimension_semantics=("parallel", "parallel"),
            vmem_limit_bytes=_VMEM_LIMIT_BYTES),
        input_output_aliases={0: 0},
    )(o2d, corr_row)


# ------------------------- single-jit functional forward --------------------- #

def _make_forward(dim_size, step_size):
    @jax.jit
    def fwd(x, delta, m, v, abs_mean, global_step, step, rng):
        n = x.size
        # Match PyTorch promotion: inputs + f32 delta -> promoted dtype output.
        out_dtype = jnp.promote_types(x.dtype, delta.dtype)
        w, rep, lane_tile, row_tile, rows = _plan_layout(
            n, dim_size, x.dtype.itemsize, jnp.dtype(out_dtype).itemsize)

        x2d = x.reshape(rows, w)                          # free: contiguous row-major
        delta_row = jnp.tile(delta, rep).reshape(1, w)    # OLD delta, f32, tiny

        # Fused pass: out = x + old_delta, plus global sum for the abs-mean EMA.
        out2d, tot = _pallas_fused_add_sum(x2d, delta_row, out_dtype,
                                           row_tile, lane_tile)
        mean_inputs = tot[0, 0] / jnp.float32(n)

        # EMA update + adaptive reset + step bookkeeping (tiny, all on device).
        alpha = jnp.float32(0.5)
        new_abs_mean = alpha * jnp.abs(mean_inputs) + (1.0 - alpha) * abs_mean[0]
        delta_max = new_abs_mean * jnp.float32(0.2)
        do_reset = jnp.abs(jnp.mean(delta)) >= delta_max

        sigma3 = delta_max / 5.0
        rng, sub = jax.random.split(rng)
        # TODO(synk): torch.nn.init.normal_ uses a different RNG stream; values differ.
        noise = sigma3 * jax.random.normal(sub, delta.shape, dtype=jnp.float32)

        new_delta = jnp.where(do_reset, noise, delta)
        new_m = jnp.where(do_reset, jnp.zeros_like(m), m)
        new_v = jnp.where(do_reset, jnp.zeros_like(v), v)
        gs = jnp.where(do_reset, jnp.int32(1), global_step)
        st = jnp.where(do_reset, jnp.int32(0), step)
        st = (st + jnp.int32(1)) % jnp.int32(step_size)
        gs = jnp.where(st == jnp.int32(0), gs + jnp.int32(1), gs)

        # Output must use the NEW delta.  When no reset fired (common case) the
        # fused output is already exact; otherwise add the correction in place.
        corr_row = jnp.tile(new_delta - delta, rep).reshape(1, w)
        out2d = jax.lax.cond(
            do_reset,
            lambda o, c: _pallas_fixup(o, c, row_tile, lane_tile),
            lambda o, c: o,
            out2d, corr_row)

        out = out2d.reshape(x.shape)                      # free reshape, no slice/pad
        new_state = (new_delta, new_m, new_v,
                     jnp.reshape(new_abs_mean, (1,)).astype(jnp.float32),
                     gs, st, rng)
        return out, new_state

    return fwd


# -------------------------------- Module wrapper ----------------------------- #

class AdversarialPerturbationAdder:
    """JAX/Pallas port of the PyTorch module (forward pass, training mode)."""

    def __init__(self, dim_size, rho1=0.9, rho2=0.999,
                 lr_reduce=0.002 / 8e-05, step_size=4, seed=0):
        self.dim_size = dim_size
        self.rho1 = rho1
        self.rho2 = rho2
        self.lr_reduce = lr_reduce
        self.step_size = step_size
        self.training = True
        # Parameters (deterministic init, matching nn.Parameter(torch.zeros(...))).
        self.delta = jnp.zeros((dim_size,), jnp.float32)
        self.m = jnp.zeros((dim_size,), jnp.float32)
        self.v = jnp.zeros((dim_size,), jnp.float32)
        self._input_abs_mean = jnp.zeros((1,), jnp.float32)
        # Step counters kept as device scalars so no host sync is required.
        self.global_step = jnp.int32(1)
        self._step = jnp.int32(0)
        self._rng = jax.random.PRNGKey(seed)
        # Single jitted forward: pack -> fused kernel -> state update -> fix-up.
        self._fwd = _make_forward(dim_size, step_size)
        # TODO(synk): moment_based_adversarial_perturbation.backward (the Adam-like
        # delta update) is a custom autograd rule; only the forward is ported here.

    def __call__(self, inputs):
        assert inputs.shape[-1] == self.dim_size
        if not self.training:
            return inputs
        out, state = self._fwd(inputs, self.delta, self.m, self.v,
                               self._input_abs_mean, self.global_step,
                               self._step, self._rng)
        (self.delta, self.m, self.v, self._input_abs_mean,
         self.global_step, self._step, self._rng) = state
        return out


# ------------------------------------ Main ----------------------------------- #

if __name__ == "__main__":
    key = jax.random.PRNGKey(0)
    k1, k2, k3 = jax.random.split(key, 3)

    # ---- Test 1: packed lane-dense layout (W = 128), no ragged tiles -------- #
    B, S, D = 2, 8, 32
    x = jax.random.normal(k1, (B, S, D), dtype=jnp.float32)

    mod = AdversarialPerturbationAdder(dim_size=D)
    out = jax.block_until_ready(mod(x))
    assert out.shape == x.shape and out.dtype == jnp.float32
    ref = x + jnp.broadcast_to(mod.delta, x.shape)         # output uses NEW delta
    assert jnp.allclose(out, ref, atol=1e-6, rtol=1e-6)
    assert jnp.allclose(mod._input_abs_mean[0], 0.5 * jnp.abs(jnp.mean(x)),
                        atol=1e-6, rtol=1e-6)

    # Second call: EMA state carries over across calls.
    x2 = jax.random.normal(k2, (B, S, D), dtype=jnp.float32)
    prev_abs_mean = mod._input_abs_mean[0]
    out2 = jax.block_until_ready(mod(x2))
    ref2 = x2 + jnp.broadcast_to(mod.delta, x2.shape)
    assert jnp.allclose(out2, ref2, atol=1e-6, rtol=1e-6)
    assert jnp.allclose(mod._input_abs_mean[0],
                        0.5 * jnp.abs(jnp.mean(x2)) + 0.5 * prev_abs_mean,
                        atol=1e-6, rtol=1e-6)

    # ---- Test 2: ragged row tiles + unpacked fallback layout ---------------- #
    x3 = jax.random.normal(k3, (3, 5, D), dtype=jnp.float32)   # 15 rows, k=4 -> unpacked
    mod3 = AdversarialPerturbationAdder(dim_size=D)
    out3 = jax.block_until_ready(mod3(x3))
    ref3 = x3 + jnp.broadcast_to(mod3.delta, x3.shape)
    assert jnp.allclose(out3, ref3, atol=1e-6, rtol=1e-6)
    assert jnp.allclose(mod3._input_abs_mean[0], 0.5 * jnp.abs(jnp.mean(x3)),
                        atol=1e-6, rtol=1e-6)

    # ---- Test 3: bf16 inputs promote to f32 (torch: bf16 + f32 delta -> f32) - #
    xb = x.astype(jnp.bfloat16)
    modb = AdversarialPerturbationAdder(dim_size=D)
    outb = jax.block_until_ready(modb(xb))
    assert outb.dtype == jnp.float32 and outb.shape == xb.shape
    refb = xb.astype(jnp.float32) + jnp.broadcast_to(modb.delta, xb.shape)
    assert jnp.allclose(outb, refb, atol=1e-6, rtol=1e-6)

    print("KERNEL_OK")
</pallas_src>

<mosaic_0001>
module attributes {stable_mosaic.version = 11 : i64} {
  func.func @kernel(%arg0: i32, %arg1: i32, %arg2: memref<4x128xf32, #tpu.memory_space<vmem>>, %arg3: memref<1x128xf32, #tpu.memory_space<vmem>>, %arg4: memref<4x128xf32, #tpu.memory_space<vmem>>, %arg5: memref<1x1xf32, #tpu.memory_space<vmem>>, %arg6: memref<1x128xf32, #tpu.memory_space<vmem>>) attributes {dimension_semantics = [#tpu.dimension_semantics<arbitrary>, #tpu.dimension_semantics<arbitrary>], iteration_bounds = array<i64: 1, 1>, scalar_prefetch = 0 : i64, scratch_operands = 1 : i64, tpu.core_type = #tpu.core_type<tc>, window_params = [{transform_indices = @transform_0, window_bounds = array<i64: 4, 128>}, {transform_indices = @transform_1, window_bounds = array<i64: 1, 128>}, {transform_indices = @transform_2, window_bounds = array<i64: 4, 128>}, {pipeline_mode = #tpu.pipeline_mode<synchronous>, transform_indices = @transform_3, window_bounds = array<i64: 1, 1>}]} {
    %c0_i32 = arith.constant 0 : i32
    %0 = arith.cmpi eq, %arg0, %c0_i32 : i32
    %c0_i32_0 = arith.constant 0 : i32
    %1 = arith.cmpi eq, %arg1, %c0_i32_0 : i32
    %2 = arith.andi %0, %1 : i1
    %3 = arith.extui %2 : i1 to i32
    %c0_i32_1 = arith.constant 0 : i32
    %4 = arith.cmpi ne, %3, %c0_i32_1 : i32
    scf.if %4 {
      %cst_14 = arith.constant 0.000000e+00 : f32
      %20 = vector.broadcast %cst_14 : f32 to vector<1x128xf32>
      %c0_15 = arith.constant 0 : index
      %c0_16 = arith.constant 0 : index
      %21 = vector.load %arg6[%c0_15, %c0_16] : memref<1x128xf32, #tpu.memory_space<vmem>>, vector<1x128xf32>
      tpu.vector_store %arg6[%c0_15, %c0_16], %20 {strides = array<i32>} : memref<1x128xf32, #tpu.memory_space<vmem>>, vector<1x128xf32>,
    } else {
    }
    %c0 = arith.constant 0 : index
    %c0_2 = arith.constant 0 : index
    %5 = vector.load %arg2[%c0, %c0_2] : memref<4x128xf32, #tpu.memory_space<vmem>>, vector<4x128xf32>
    %c0_3 = arith.constant 0 : index
    %c0_4 = arith.constant 0 : index
    %6 = vector.load %arg3[%c0_3, %c0_4] : memref<1x128xf32, #tpu.memory_space<vmem>>, vector<1x128xf32>
    %7 = vector.broadcast %6 : vector<1x128xf32> to vector<4x128xf32>
    %8 = arith.addf %5, %7 : vector<4x128xf32>
    %c0_5 = arith.constant 0 : index
    %c0_6 = arith.constant 0 : index
    %9 = vector.load %arg4[%c0_5, %c0_6] : memref<4x128xf32, #tpu.memory_space<vmem>>, vector<4x128xf32>
    tpu.vector_store %arg4[%c0_5, %c0_6], %8 {strides = array<i32>} : memref<4x128xf32, #tpu.memory_space<vmem>>, vector<4x128xf32>,
    %c0_7 = arith.constant 0 : index
    %c0_8 = arith.constant 0 : index
    %10 = vector.load %arg6[%c0_7, %c0_8] : memref<1x128xf32, #tpu.memory_space<vmem>>, vector<1x128xf32>
    %cst = arith.constant dense<0.000000e+00> : vector<128xf32>
    %11 = vector.multi_reduction <add>, %5, %cst [0] : vector<4x128xf32> to vector<128xf32>
    %12 = vector.shape_cast %11 : vector<128xf32> to vector<1x128xf32>
    %13 = arith.addf %10, %12 : vector<1x128xf32>
    %c0_9 = arith.constant 0 : index
    %c0_10 = arith.constant 0 : index
    %14 = vector.load %arg6[%c0_9, %c0_10] : memref<1x128xf32, #tpu.memory_space<vmem>>, vector<1x128xf32>
    tpu.vector_store %arg6[%c0_9, %c0_10], %13 {strides = array<i32>} : memref<1x128xf32, #tpu.memory_space<vmem>>, vector<1x128xf32>,
    %c0_i32_11 = arith.constant 0 : i32
    %15 = arith.cmpi eq, %arg0, %c0_i32_11 : i32
    %c0_i32_12 = arith.constant 0 : i32
    %16 = arith.cmpi eq, %arg1, %c0_i32_12 : i32
    %17 = arith.andi %15, %16 : i1
    %18 = arith.extui %17 : i1 to i32
    %c0_i32_13 = arith.constant 0 : i32
    %19 = arith.cmpi ne, %18, %c0_i32_13 : i32
    scf.if %19 {
      %c0_14 = arith.constant 0 : index
      %c0_15 = arith.constant 0 : index
      %20 = vector.load %arg6[%c0_14, %c0_15] : memref<1x128xf32, #tpu.memory_space<vmem>>, vector<1x128xf32>
      %cst_16 = arith.constant dense<0.000000e+00> : vector<1xf32>
      %21 = vector.multi_reduction <add>, %20, %cst_16 [1] : vector<1x128xf32> to vector<1xf32>
      %22 = vector.shape_cast %21 : vector<1xf32> to vector<1x1xf32>
      %c0_17 = arith.constant 0 : index
      %c0_18 = arith.constant 0 : index
      %23 = vector.load %arg5[%c0_17, %c0_18] : memref<1x1xf32, #tpu.memory_space<vmem>>, vector<1x1xf32>
      tpu.vector_store %arg5[%c0_17, %c0_18], %22 {strides = array<i32>} : memref<1x1xf32, #tpu.memory_space<vmem>>, vector<1x1xf32>,
    } else {
    }
    return
  }
  func.func @transform_0(%arg0: i32, %arg1: i32) -> (i32, i32) {
    %c0_i32 = arith.constant 0 : i32
    return %arg0, %arg1 : i32, i32
  }
  func.func @transform_1(%arg0: i32, %arg1: i32) -> (i32, i32) {
    %c0_i32 = arith.constant 0 : i32
    %c0_i32_0 = arith.constant 0 : i32
    return %c0_i32, %arg1 : i32, i32
  }
  func.func @transform_2(%arg0: i32, %arg1: i32) -> (i32, i32) {
    %c0_i32 = arith.constant 0 : i32
    return %arg0, %arg1 : i32, i32
  }
  func.func @transform_3(%arg0: i32, %arg1: i32) -> (i32, i32) {
    %c0_i32 = arith.constant 0 : i32
    %c0_i32_0 = arith.constant 0 : i32
    %c0_i32_1 = arith.constant 0 : i32
    return %c0_i32, %c0_i32_0 : i32, i32
  }
}

module attributes {stable_mosaic.version = 11 : i64} {
  func.func @kernel(%arg0: i32, %arg1: i32, %arg2: memref<4x128xf32, #tpu.memory_space<vmem>>, %arg3: memref<1x128xf32, #tpu.memory_space<vmem>>, %arg4: memref<4x128xf32, #tpu.memory_space<vmem>>) attributes {dimension_semantics = [#tpu.dimension_semantics<parallel>, #tpu.dimension_semantics<parallel>], iteration_bounds = array<i64: 1, 1>, scalar_prefetch = 0 : i64, scratch_operands = 0 : i64, tpu.core_type = #tpu.core_type<tc>, window_params = [{transform_indices = @transform_0, window_bounds = array<i64: 4, 128>}, {transform_indices = @transform_1, window_bounds = array<i64: 1, 128>}, {transform_indices = @transform_2, window_bounds = array<i64: 4, 128>}]} {
    %c0 = arith.constant 0 : index
    %c0_0 = arith.constant 0 : index
    %0 = vector.load %arg2[%c0, %c0_0] : memref<4x128xf32, #tpu.memory_space<vmem>>, vector<4x128xf32>
    %c0_1 = arith.constant 0 : index
    %c0_2 = arith.constant 0 : index
    %1 = vector.load %arg3[%c0_1, %c0_2] : memref<1x128xf32, #tpu.memory_space<vmem>>, vector<1x128xf32>
    %2 = vector.broadcast %1 : vector<1x128xf32> to vector<4x128xf32>
    %3 = arith.addf %0, %2 : vector<4x128xf32>
    %c0_3 = arith.constant 0 : index
    %c0_4 = arith.constant 0 : index
    %4 = vector.load %arg4[%c0_3, %c0_4] : memref<4x128xf32, #tpu.memory_space<vmem>>, vector<4x128xf32>
    tpu.vector_store %arg4[%c0_3, %c0_4], %3 {strides = array<i32>} : memref<4x128xf32, #tpu.memory_space<vmem>>, vector<4x128xf32>,
    return
  }
  func.func @transform_0(%arg0: i32, %arg1: i32) -> (i32, i32) {
    %c0_i32 = arith.constant 0 : i32
    return %arg0, %arg1 : i32, i32
  }
  func.func @transform_1(%arg0: i32, %arg1: i32) -> (i32, i32) {
    %c0_i32 = arith.constant 0 : i32
    %c0_i32_0 = arith.constant 0 : i32
    return %c0_i32, %arg1 : i32, i32
  }
  func.func @transform_2(%arg0: i32, %arg1: i32) -> (i32, i32) {
    %c0_i32 = arith.constant 0 : i32
    return %arg0, %arg1 : i32, i32
  }
}

</mosaic_0001>

<llo_original>
// kernel: tile.14
$region0: #{tile.14}
  %s0 = inlined_call_operand.vmem [shape: f32[4,32], index: 0, kind: input, shape index: {}]
  %s1 = inlined_call_operand.vmem [shape: f32[1,128], index: 1, kind: output, shape index: {}]
  $region1: #{tile.14} parent=0
    #allocation0 [shape = 'u8[4096]{0}', space=vmem, size = 0x1000, scoped, tag = 'scoped mem for output reshape']
    #allocation1 [shape = 'u8[4096]{0}', space=vmem, size = 0x1000, scoped, tag = 'scoped mem for input reshape']
    %s3 = sshllo.u32 0, 4
    %v4 = vld [vmem:[%s0] sm:%s3]
    %5 = vst [vmem:[#allocation1] sm:%s3] %v4
    %v6 = vld [vmem:[#allocation1] sm:$0x1]
    %vm7 = vcmask 261120
    %8 = vst.msk [vmem:[#allocation0] sm:$0x1] %vm7, %v6
    %s9 = scalar_lea.vmem [#allocation1], 3
    %v10 = vld [vmem:[%s9] sm:$0x1]
    %11 = vrot.lane.b32.xlu0 %v10, 96
    %v12 = vpop.permute.xlu0 %11
    %vm13 = vcmask 1048320
    %14 = vst.msk [vmem:[#allocation0] sm:$0x1] %vm13, %v12
    %s15 = scalar_lea.vmem [#allocation1], 2
    %v16 = vld [vmem:[%s15] sm:$0x1]
    %17 = vrot.lane.b32.xlu0 %v16, 64
    %v18 = vpop.permute.xlu0 %17
    %vm19 = vcmask 785920
    %20 = vst.msk [vmem:[#allocation0] sm:$0x1] %vm19, %v18
    %s21 = scalar_lea.vmem [#allocation1], 1
    %v22 = vld [vmem:[%s21] sm:$0x1]
    %23 = vrot.lane.b32.xlu0 %v22, 32
    %v24 = vpop.permute.xlu0 %23
    %vm25 = vcmask 523520
    %26 = vst.msk [vmem:[#allocation0] sm:$0x1] %vm25, %v24
    %s28 = sshllo.u32 0, 1
    %v30 = vld [vmem:[#allocation0] sm:%s28]
    %s31 = sshllo.u32 0, 1
    %32 = vst [vmem:[%s1] sm:%s31] %v30

// kernel: tile.13
$region0: #{tile.13}
  #allocation0 [shape = 's32[1]{0}', space=sflag, size = 0x4, scoped, tag = 'scoped memory for tile.13']
  %s0 = inlined_call_operand.vmem [shape: f32[32], index: 0, kind: input, shape index: {}]
  %s1 = inlined_call_operand.vmem [shape: f32[4,32], index: 1, kind: output, shape index: {}]
  // Predicated region
  $region2: #{tile.13} parent=0 // pred_check
    _
  $region3: #{tile.13} parent=0 // pred_check_branch
    %3 = sbr.rel (0) target = $region5
  $region4: #{tile.13} parent=0 // pred_region
    _
  $region5: #{tile.13} parent=0 // pred_fallthru
    _
  %v4 = vld [vmem:[%s0] ss:$0 sm:$0xff]
  %5 = vst [vmem:[%s1] sm:$0xf] %v4

// kernel: sub.0
$region0: #{sub.0}
  #allocation0 [shape = 's32[1]{0}', space=sflag, size = 0x4, scoped, tag = 'scoped memory for sub.0']
  %s0 = inlined_call_operand.vmem [shape: f32[32], index: 0, kind: input, shape index: {}]
  %s1 = inlined_call_operand.vmem [shape: f32[32], index: 1, kind: input, shape index: {}]
  %s2 = inlined_call_operand.vmem [shape: f32[32], index: 2, kind: output, shape index: {}]
  %v3 = vld [vmem:[%s0] sm:$0x1]
  %v4 = vld [vmem:[%s1] sm:$0x1]
  %5 = xla_tuple %v3, %v4
  %6 = xla_tuple %5
  %v7 = vsub.f32 %v3, %v4
  %8 = xla_tuple %v7
  %9 = vst [vmem:[%s2] sm:$0x1] %v7

// kernel: branch_1_fun.1
$region0: #{branch_1_fun.1}
  #allocation0 [shape = 'u32[]', space=smem, size = 0x4, offset = 0x4, fixed_abs, tag = 'smem constant byte address 0x4 - core index']
  #allocation1 [shape = 'u32[144,128]{1,0:T(1,128)}', space=vmem, size = 0x12000, scoped, tag = 'internal scratch']
  %s0 = inlined_call_operand.vmem [shape: f32[4,128], index: 0, kind: input, shape index: {}, may-alias: {0,2}]
  %s1 = inlined_call_operand.vmem [shape: f32[1,128], index: 1, kind: input, shape index: {}]
  %s2 = inlined_call_operand.vmem [shape: f32[4,128], index: 2, kind: output, shape index: {}, may-alias: {0,2}]
  %s3 = sld [smem:[#allocation0]]
  $region18: #{branch_1_fun.1} parent=0
    _
  %s5 = ssub.s32 1, %s3
  %s6 = scalar_select 0, %s5, %s3
  // Predicated region
  $region2: #{branch_1_fun.1} parent=0 // pred_check
    _
  $region3: #{branch_1_fun.1} parent=0 // pred_check_branch
    %8 = sbr.rel (0) target = $region5
  $region4: #{branch_1_fun.1} parent=0 // pred_region
    _
  $region5: #{branch_1_fun.1} parent=0 // pred_fallthru
    _
  // Predicated region
  $region6: #{branch_1_fun.1} parent=0 // pred_check
    _
  $region7: #{branch_1_fun.1} parent=0 // pred_check_branch
    %10 = sbr.rel (0) target = $region9
  $region8: #{branch_1_fun.1} parent=0 // pred_region
    _
  $region9: #{branch_1_fun.1} parent=0 // pred_fallthru
    _
  %v11 = vld [vmem:[%s0] sm:$0xf]
  %v12 = vld [vmem:[%s1] sm:$0x1]
  %v14 = vlaneseq
  %v15 = vshrl.u32 %v14, 7
  %v16 = vsub.s32 0, %v15
  %v17 = vrot.slane %v12, %v16
  %v19 = vadd.f32 %v11, %v17
  %20 = vst [vmem:[%s2] sm:$0xf] %v19
  // Predicated region
  $region10: #{branch_1_fun.1} parent=0 // pred_check
    _
  $region11: #{branch_1_fun.1} parent=0 // pred_check_branch
    %22 = sbr.rel (0) target = $region13
  $region12: #{branch_1_fun.1} parent=0 // pred_region
    _
  $region13: #{branch_1_fun.1} parent=0 // pred_fallthru
    _
  // Predicated region
  $region14: #{branch_1_fun.1} parent=0 // pred_check
    _
  $region15: #{branch_1_fun.1} parent=0 // pred_check_branch
    %24 = sbr.rel (0) target = $region17
  $region16: #{branch_1_fun.1} parent=0 // pred_region
    _
  $region17: #{branch_1_fun.1} parent=0 // pred_fallthru
    _

// kernel: fwd.1
$region0: #{fwd.1}
  #allocation0 [shape = 'u32[]', space=smem, size = 0x4, offset = 0x4, fixed_abs, tag = 'smem constant byte address 0x4 - core index']
  #allocation1 [shape = 'u32[144,128]{1,0:T(1,128)}', space=vmem, size = 0x12000, scoped, tag = 'internal scratch']
  #allocation2 [shape = 'f32[1,128]{1,0:T(1,128)}', space=vmem, size = 0x200, scoped, tag = 'scratch operand']
  %s0 = inlined_call_operand.vmem [shape: f32[4,128], index: 0, kind: input, shape index: {}]
  %s1 = inlined_call_operand.vmem [shape: f32[1,128], index: 1, kind: input, shape index: {}]
  %s2 = inlined_call_operand.vmem [shape: f32[4,128], index: 2, kind: output, shape index: {0}]
  %s3 = inlined_call_operand.hbm [shape: f32[1,1], index: 3, kind: output, shape index: {1}]
  %4 = xla_tuple %s2, %s3
  %s5 = sld [smem:[#allocation0]]
  $region34: #{fwd.1} parent=0
    _
  %s7 = ssub.s32 1, %s5
  %s8 = scalar_select 0, %s7, %s5
  $region1: #{fwd.1} parent=0
    #allocation3 [shape = 'u8[512]{0}', space=vmem, size = 0x400, scoped, tag = 'output window, operand 1, single buffered']
    #allocation4 [shape = 's32[1]{0}', space=sflag, size = 0x4, scoped, tag = 'scoped memory for fwd.1']
    %9 = vsyncpa [#allocation4], 0
    // Predicated region
    $region2: #{fwd.1} parent=1 // pred_check
      _
    $region3: #{fwd.1} parent=1 // pred_check_branch
      %11 = sbr.rel (0) target = $region5
    $region4: #{fwd.1} parent=1 // pred_region
      _
    $region5: #{fwd.1} parent=1 // pred_fallthru
      _
    // Predicated region
    $region6: #{fwd.1} parent=1 // pred_check
      _
    $region7: #{fwd.1} parent=1 // pred_check_branch
      %13 = sbr.rel (0) target = $region9
    $region8: #{fwd.1} parent=1 // pred_region
      _
    $region9: #{fwd.1} parent=1 // pred_fallthru
      _
    %p14 = scmp.eq.s32.totalorder 0, 0
    %p15 = scmp.eq.s32.totalorder 0, 0
    %p16 = pnand %p14, %p15
    %p17 = pneg %p16
    // Predicated region
    $region10: #{fwd.1} parent=1 // pred_check
      _
    $region11: #{fwd.1} parent=1 // pred_check_branch
      %19 = sbr.rel (%p16) target = $region13
    $region12: #{fwd.1} parent=1 // pred_region
      %20 = vst [vmem:[#allocation2] sm:$0x1] 0.0
    $region13: #{fwd.1} parent=1 // pred_fallthru
      _
    %v21 = vld [vmem:[%s0] sm:$0xf]
    %v22 = vld [vmem:[%s1] sm:$0x1]
    %v24 = vlaneseq
    %v25 = vshrl.u32 %v24, 7
    %v26 = vsub.s32 0, %v25
    %v27 = vrot.slane %v22, %v26
    %v29 = vadd.f32 %v21, %v27
    %30 = vst [vmem:[%s2] sm:$0xf] %v29
    %v31 = vld [vmem:[#allocation2] sm:$0x1]
    %vm32 = vcmask 1043456
    %v33 = vsel %vm32, %v21, 0.0
    %v34 = vrot.slane %v33, 4
    %v35 = vadd.f32 %v33, %v34
    %v36 = vrot.slane %v35, 2
    %v37 = vadd.f32 %v35, %v36
    %v38 = vrot.slane %v37, 1
    %v39 = vadd.f32 %v37, %v38
    %v40 = vadd.f32 %v31, %v39
    %41 = vst [vmem:[#allocation2] sm:$0x1] %v40
    // Predicated region
    $region14: #{fwd.1} parent=1 // pred_check
      _
    $region15: #{fwd.1} parent=1 // pred_check_branch
      %43 = sbr.rel (%p16) target = $region17
    $region16: #{fwd.1} parent=1 // pred_region
      %v44 = vld [vmem:[#allocation2] sm:$0x1]
      %vm45 = vcmask 1040384
      %v46 = vsel %vm45, %v44, 0.0
      %47 = vadd.xlane.f32.xlu0 %v46
      %v48 = vpop.xlane.xlu0 %47
      %vm49 = vcmask 0
      %50 = vst.msk [vmem:[#allocation3] sm:$0x1] %vm49, %v48
    $region17: #{fwd.1} parent=1 // pred_fallthru
      _
    // Predicated region
    $region18: #{fwd.1} parent=1 // pred_check
      _
    $region19: #{fwd.1} parent=1 // pred_check_branch
      %52 = sbr.rel (0) target = $region21
    $region20: #{fwd.1} parent=1 // pred_region
      _
    $region21: #{fwd.1} parent=1 // pred_fallthru
      _
    // Predicated region
    $region22: #{fwd.1} parent=1 // pred_check
      _
    $region23: #{fwd.1} parent=1 // pred_check_branch
      %54 = sbr.rel (0) target = $region25
    $region24: #{fwd.1} parent=1 // pred_region
      %s56 = ssub.s32 16, 16
      %57 = vsyncadd [#allocation4], %s56
      %s59 = sshll.u32 [#allocation3], 4
      %s60 = int_to_ptr.vmem [resolvable:$true] %s59
      %62 = dma.vmem_to_hbm [thread:$0]  %s60, 16, %s3, [#allocation4]
    $region25: #{fwd.1} parent=1 // pred_fallthru
      _
    // Predicated region
    $region26: #{fwd.1} parent=1 // pred_check
      _
    $region27: #{fwd.1} parent=1 // pred_check_branch
      %64 = sbr.rel (0) target = $region29
    $region28: #{fwd.1} parent=1 // pred_region
      _
    $region29: #{fwd.1} parent=1 // pred_fallthru
      _
    // Predicated region
    $region30: #{fwd.1} parent=1 // pred_check
      _
    $region31: #{fwd.1} parent=1 // pred_check_branch
      %66 = sbr.rel (0) target = $region33
    $region32: #{fwd.1} parent=1 // pred_region
      %67 = dma.done [#allocation4], 16
    $region33: #{fwd.1} parent=1 // pred_fallthru
      _
    %68 = vsyncpa [#allocation4], 1

</llo_original>
